<compile_context>
chip_gen: v7x
topology: tpu7x:2x2x1
jax: 0.10.0
libtpu: 0.0.40
codegen_flags: <defaults>
</compile_context>

<pallas_src>
import numpy as np
import jax
import jax.numpy as jnp
from jax.experimental import pallas as pl
from jax.experimental.pallas import tpu as pltpu

EPS = 1e-5


def bottleneck_kernel(x_ref, w1_ref, w2_ref, fold_ref, expand_ref,
                      g1_ref, b1_ref, g2_ref, b2_ref, out_ref, y1p_ref):
    # x_ref:      (N, H+2, W*Cin)  f32  input, zero-padded along H only (lane = w*Cin+ci)
    # w1_ref:     (3*W*Cin, W*C2)  bf16 conv1 as banded matmul weight
    # w2_ref:     (3*W*C2,  W*C2)  bf16 conv2 as banded matmul weight
    # fold_ref:   (W*C2, C2)       f32  lane -> channel summation matrix
    # expand_ref: (C2, W*C2)       f32  channel -> lane broadcast matrix
    # g*/b*_ref:  (1, C2)          f32  BN affine params
    # out_ref:    (N*H, W*C2)      f32  lane-dense output (row-major NHWC flat)
    # y1p_ref:    (N, H+2, W*C2)   f32  scratch: H-padded relu(bn1(conv1)) activation
    N, Hp2, WCin = x_ref.shape
    H = Hp2 - 2
    NH, WC2 = out_ref.shape
    C2 = fold_ref.shape[1]
    W = WC2 // C2
    inv_count = 1.0 / (NH * W)          # 1/(N*H*W): BN biased-variance count

    def bn_relu(h, g_ref, b_ref):
        # One-pass batch statistics: per-lane sum / sum-of-squares, folded to channels
        # with tiny MXU dots (lane = w*C2 + c), then expanded back to per-lane scale/shift.
        colsum = jnp.sum(h, axis=0, keepdims=True)                  # (1, W*C2)
        colsq = jnp.sum(h * h, axis=0, keepdims=True)               # (1, W*C2)
        chsum = jnp.dot(colsum, fold_ref[...])                      # (1, C2)
        chsq = jnp.dot(colsq, fold_ref[...])                        # (1, C2)
        mean = chsum * inv_count
        var = jnp.maximum(chsq * inv_count - mean * mean, 0.0)
        inv = jax.lax.rsqrt(var + EPS)
        scale_c = g_ref[...] * inv                                  # (1, C2)
        shift_c = b_ref[...] - mean * scale_c                       # (1, C2)
        scale_l = jnp.dot(scale_c, expand_ref[...])                 # (1, W*C2)
        shift_l = jnp.dot(shift_c, expand_ref[...])                 # (1, W*C2)
        return jnp.maximum(h * scale_l + shift_l, 0.0)              # (N*H, W*C2)

    # ---- conv1: single banded matmul, K = 3*W*Cin, lane-dense W*C2 output ----
    a1 = jnp.concatenate(
        [x_ref[:, kh:kh + H, :].reshape(NH, WCin) for kh in range(3)], axis=-1)
    h1 = jnp.dot(a1.astype(jnp.bfloat16), w1_ref[...],
                 preferred_element_type=jnp.float32)                # (N*H, W*C2) f32
    y1 = bn_relu(h1, g1_ref, b1_ref)

    # ---- H-pad the activation for conv2: zero only the border rows, write interior ----
    y1p_ref[:, 0:1, :] = jnp.zeros((N, 1, WC2), jnp.float32)
    y1p_ref[:, H + 1:H + 2, :] = jnp.zeros((N, 1, WC2), jnp.float32)
    y1p_ref[:, 1:H + 1, :] = y1.reshape(N, H, WC2)

    # ---- conv2: single banded matmul, K = 3*W*C2 ----
    a2 = jnp.concatenate(
        [y1p_ref[:, kh:kh + H, :].reshape(NH, WC2) for kh in range(3)], axis=-1)
    h2 = jnp.dot(a2.astype(jnp.bfloat16), w2_ref[...],
                 preferred_element_type=jnp.float32)                # (N*H, W*C2) f32
    out_ref[...] = bn_relu(h2, g2_ref, b2_ref)


def bottleneck_forward(x_nchw, w1, mask1, w2, mask2, g1, b1, g2, b2):
    """x_nchw: (N, Cin, H, W) f32; w1: (C2, Cin, 3, 3); w2: (C2, C2, 3, 3)."""
    N, Cin, H, W = x_nchw.shape
    C2 = w1.shape[0]
    WC2 = W * C2

    # mask the conv weights (masks are all-ones in the module; kept for fidelity)
    w1m = (w1 * mask1).astype(jnp.float32)
    w2m = (w2 * mask2).astype(jnp.float32)

    # NCHW -> NHWC, zero-pad along H only (W padding is absorbed into the banded
    # weights), and flatten (W, C) into the lane dimension.
    x = jnp.transpose(x_nchw, (0, 2, 3, 1)).astype(jnp.float32)
    xp = jnp.pad(x, ((0, 0), (1, 1), (0, 0), (0, 0))).reshape(N, H + 2, W * Cin)

    # Banded conv-as-matmul weights: row (kh, wi, ci) -> col (wo, co), nonzero where
    # wi == wo + kw - 1 (zero-pad boundary handled by absent band entries).
    S = np.stack([np.eye(W, k=1), np.eye(W, k=0), np.eye(W, k=-1)]).astype(np.float32)
    S = jnp.asarray(S)                                   # S[kw, wi, wo]

    def band(wm):                                        # wm: (Cout, Cin_, 3, 3)
        cout, cin_, _, _ = wm.shape
        wt = jnp.transpose(wm, (2, 3, 1, 0))             # (kh, kw, ci, co)
        wb = jnp.einsum('kab,hkcd->hacbd', S, wt)        # (kh, wi, ci, wo, co)
        return wb.reshape(3 * W * cin_, W * cout).astype(jnp.bfloat16)

    w1b = band(w1m)                                      # (3*W*Cin, W*C2)
    w2b = band(w2m)                                      # (3*W*C2,  W*C2)

    # lane<->channel fold / expand matrices for BN stats (lane index = w*C2 + c)
    expand = jnp.asarray(np.tile(np.eye(C2, dtype=np.float32), (1, W)))  # (C2, W*C2)
    fold = expand.T                                                       # (W*C2, C2)

    g1r = g1.reshape(1, C2).astype(jnp.float32)
    b1r = b1.reshape(1, C2).astype(jnp.float32)
    g2r = g2.reshape(1, C2).astype(jnp.float32)
    b2r = b2.reshape(1, C2).astype(jnp.float32)

    vmem = pl.BlockSpec(memory_space=pltpu.MemorySpace.VMEM)
    out2d = pl.pallas_call(
        bottleneck_kernel,
        out_shape=jax.ShapeDtypeStruct((N * H, WC2), jnp.float32),
        in_specs=[vmem] * 9,
        out_specs=vmem,
        scratch_shapes=[
            pltpu.VMEM((N, H + 2, WC2), jnp.float32),    # H-padded relu(bn1) activation
        ],
    )(xp, w1b, w2b, fold, expand, g1r, b1r, g2r, b2r)

    # lane-dense (N*H, W*C2) slab -> NHWC -> PyTorch NCHW
    out_nhwc = out2d.reshape(N, H, W, C2)
    return jnp.transpose(out_nhwc, (0, 3, 1, 2))


if __name__ == "__main__":
    # Small shapes consistent with the module: input_channels=4 -> hidden channels 8.
    N, Cin, H, W = 2, 4, 16, 16
    C2 = 2 * Cin

    key = jax.random.PRNGKey(0)
    kx, kw1, kw2 = jax.random.split(key, 3)

    x = jax.random.normal(kx, (N, Cin, H, W), dtype=jnp.float32)

    # Deterministic parameter init (shapes from the module's __init__).
    w1 = jax.random.normal(kw1, (C2, Cin, 3, 3), dtype=jnp.float32) * 0.1
    w2 = jax.random.normal(kw2, (C2, C2, 3, 3), dtype=jnp.float32) * 0.1
    mask1 = jnp.ones((C2, Cin, 3, 3), dtype=jnp.float32)   # block_masks[0]
    mask2 = jnp.ones((C2, C2, 3, 3), dtype=jnp.float32)    # block_masks[1]
    g1 = jnp.ones((C2,), dtype=jnp.float32)                # BN affine defaults
    b1 = jnp.zeros((C2,), dtype=jnp.float32)
    g2 = jnp.ones((C2,), dtype=jnp.float32)
    b2 = jnp.zeros((C2,), dtype=jnp.float32)

    out = bottleneck_forward(x, w1, mask1, w2, mask2, g1, b1, g2, b2)
    jax.block_until_ready(out)
    assert out.shape == (N, C2, H, W)
    print("KERNEL_OK")
</pallas_src>

<mosaic_0001>
module attributes {stable_mosaic.version = 11 : i64} {
  func.func @bottleneck_kernel(%arg0: memref<2x18x64xf32, #tpu.memory_space<vmem>>, %arg1: memref<192x128xbf16, #tpu.memory_space<vmem>>, %arg2: memref<384x128xbf16, #tpu.memory_space<vmem>>, %arg3: memref<128x8xf32, #tpu.memory_space<vmem>>, %arg4: memref<8x128xf32, #tpu.memory_space<vmem>>, %arg5: memref<1x8xf32, #tpu.memory_space<vmem>>, %arg6: memref<1x8xf32, #tpu.memory_space<vmem>>, %arg7: memref<1x8xf32, #tpu.memory_space<vmem>>, %arg8: memref<1x8xf32, #tpu.memory_space<vmem>>, %arg9: memref<32x128xf32, #tpu.memory_space<vmem>>, %arg10: memref<2x18x128xf32, #tpu.memory_space<vmem>>) attributes {dimension_semantics = [], scalar_prefetch = 0 : i64, scratch_operands = 1 : i64, tpu.core_type = #tpu.core_type<tc>} {
    %c0 = arith.constant 0 : index
    %c0_0 = arith.constant 0 : index
    %c0_1 = arith.constant 0 : index
    %0 = vector.load %arg0[%c0, %c0_0, %c0_1] : memref<2x18x64xf32, #tpu.memory_space<vmem>>, vector<2x16x64xf32>
    %1 = vector.shape_cast %0 : vector<2x16x64xf32> to vector<32x64xf32>
    %c0_2 = arith.constant 0 : index
    %c1 = arith.constant 1 : index
    %c0_3 = arith.constant 0 : index
    %2 = vector.load %arg0[%c0_2, %c1, %c0_3] : memref<2x18x64xf32, #tpu.memory_space<vmem>>, vector<2x16x64xf32>
    %3 = vector.shape_cast %2 : vector<2x16x64xf32> to vector<32x64xf32>
    %c0_4 = arith.constant 0 : index
    %c2 = arith.constant 2 : index
    %c0_5 = arith.constant 0 : index
    %4 = vector.load %arg0[%c0_4, %c2, %c0_5] : memref<2x18x64xf32, #tpu.memory_space<vmem>>, vector<2x16x64xf32>
    %5 = vector.shape_cast %4 : vector<2x16x64xf32> to vector<32x64xf32>
    %6 = tpu.concatenate %1, %3, %5 in 1 : vector<32x64xf32>, vector<32x64xf32>, vector<32x64xf32> -> vector<32x192xf32>
    %7 = arith.truncf %6 : vector<32x192xf32> to vector<32x192xbf16>
    %c0_6 = arith.constant 0 : index
    %c0_7 = arith.constant 0 : index
    %8 = vector.load %arg1[%c0_6, %c0_7] : memref<192x128xbf16, #tpu.memory_space<vmem>>, vector<192x128xbf16>
    %cst = arith.constant dense<0.000000e+00> : vector<32x128xf32>
    %9 = tpu.matmul %7, %8, %cst {dimension_numbers = #tpu.dot_dimension_numbers<[1], [0], [0], [1], [0, 0, 1, 1], [], []>} : vector<32x192xbf16>, vector<192x128xbf16>, vector<32x128xf32> -> vector<32x128xf32>
    %cst_8 = arith.constant dense<0.000000e+00> : vector<128xf32>
    %10 = vector.multi_reduction <add>, %9, %cst_8 [0] : vector<32x128xf32> to vector<128xf32>
    %11 = vector.shape_cast %10 : vector<128xf32> to vector<1x128xf32>
    %12 = arith.mulf %9, %9 : vector<32x128xf32>
    %cst_9 = arith.constant dense<0.000000e+00> : vector<128xf32>
    %13 = vector.multi_reduction <add>, %12, %cst_9 [0] : vector<32x128xf32> to vector<128xf32>
    %14 = vector.shape_cast %13 : vector<128xf32> to vector<1x128xf32>
    %c0_10 = arith.constant 0 : index
    %c0_11 = arith.constant 0 : index
    %15 = vector.load %arg3[%c0_10, %c0_11] : memref<128x8xf32, #tpu.memory_space<vmem>>, vector<128x8xf32>
    %cst_12 = arith.constant dense<0.000000e+00> : vector<1x8xf32>
    %16 = tpu.matmul %11, %15, %cst_12 {dimension_numbers = #tpu.dot_dimension_numbers<[1], [0], [0], [1], [0, 0, 1, 1], [], []>} : vector<1x128xf32>, vector<128x8xf32>, vector<1x8xf32> -> vector<1x8xf32>
    %c0_13 = arith.constant 0 : index
    %c0_14 = arith.constant 0 : index
    %17 = vector.load %arg3[%c0_13, %c0_14] : memref<128x8xf32, #tpu.memory_space<vmem>>, vector<128x8xf32>
    %cst_15 = arith.constant dense<0.000000e+00> : vector<1x8xf32>
    %18 = tpu.matmul %14, %17, %cst_15 {dimension_numbers = #tpu.dot_dimension_numbers<[1], [0], [0], [1], [0, 0, 1, 1], [], []>} : vector<1x128xf32>, vector<128x8xf32>, vector<1x8xf32> -> vector<1x8xf32>
    %cst_16 = arith.constant 0.001953125 : f32
    %19 = vector.broadcast %cst_16 : f32 to vector<1x8xf32>
    %20 = arith.mulf %16, %19 : vector<1x8xf32>
    %cst_17 = arith.constant 0.001953125 : f32
    %21 = vector.broadcast %cst_17 : f32 to vector<1x8xf32>
    %22 = arith.mulf %18, %21 : vector<1x8xf32>
    %23 = arith.mulf %20, %20 : vector<1x8xf32>
    %24 = arith.subf %22, %23 : vector<1x8xf32>
    %cst_18 = arith.constant 0.000000e+00 : f32
    %25 = vector.broadcast %cst_18 : f32 to vector<1x8xf32>
    %26 = arith.maximumf %24, %25 : vector<1x8xf32>
    %cst_19 = arith.constant 9.99999974E-6 : f32
    %27 = vector.broadcast %cst_19 : f32 to vector<1x8xf32>
    %28 = arith.addf %26, %27 : vector<1x8xf32>
    %29 = math.rsqrt %28 : vector<1x8xf32>
    %c0_20 = arith.constant 0 : index
    %c0_21 = arith.constant 0 : index
    %30 = vector.load %arg5[%c0_20, %c0_21] : memref<1x8xf32, #tpu.memory_space<vmem>>, vector<1x8xf32>
    %31 = arith.mulf %30, %29 : vector<1x8xf32>
    %c0_22 = arith.constant 0 : index
    %c0_23 = arith.constant 0 : index
    %32 = vector.load %arg6[%c0_22, %c0_23] : memref<1x8xf32, #tpu.memory_space<vmem>>, vector<1x8xf32>
    %33 = arith.mulf %20, %31 : vector<1x8xf32>
    %34 = arith.subf %32, %33 : vector<1x8xf32>
    %c0_24 = arith.constant 0 : index
    %c0_25 = arith.constant 0 : index
    %35 = vector.load %arg4[%c0_24, %c0_25] : memref<8x128xf32, #tpu.memory_space<vmem>>, vector<8x128xf32>
    %cst_26 = arith.constant dense<0.000000e+00> : vector<1x128xf32>
    %36 = tpu.matmul %31, %35, %cst_26 {dimension_numbers = #tpu.dot_dimension_numbers<[1], [0], [0], [1], [0, 0, 1, 1], [], []>} : vector<1x8xf32>, vector<8x128xf32>, vector<1x128xf32> -> vector<1x128xf32>
    %c0_27 = arith.constant 0 : index
    %c0_28 = arith.constant 0 : index
    %37 = vector.load %arg4[%c0_27, %c0_28] : memref<8x128xf32, #tpu.memory_space<vmem>>, vector<8x128xf32>
    %cst_29 = arith.constant dense<0.000000e+00> : vector<1x128xf32>
    %38 = tpu.matmul %34, %37, %cst_29 {dimension_numbers = #tpu.dot_dimension_numbers<[1], [0], [0], [1], [0, 0, 1, 1], [], []>} : vector<1x8xf32>, vector<8x128xf32>, vector<1x128xf32> -> vector<1x128xf32>
    %39 = vector.broadcast %36 : vector<1x128xf32> to vector<32x128xf32>
    %40 = arith.mulf %9, %39 : vector<32x128xf32>
    %41 = vector.broadcast %38 : vector<1x128xf32> to vector<32x128xf32>
    %42 = arith.addf %40, %41 : vector<32x128xf32>
    %cst_30 = arith.constant 0.000000e+00 : f32
    %43 = vector.broadcast %cst_30 : f32 to vector<32x128xf32>
    %44 = arith.maximumf %42, %43 : vector<32x128xf32>
    %cst_31 = arith.constant 0.000000e+00 : f32
    %45 = vector.broadcast %cst_31 : f32 to vector<2x1x128xf32>
    %c0_32 = arith.constant 0 : index
    %c0_33 = arith.constant 0 : index
    %c0_34 = arith.constant 0 : index
    %46 = vector.load %arg10[%c0_32, %c0_33, %c0_34] : memref<2x18x128xf32, #tpu.memory_space<vmem>>, vector<2x1x128xf32>
    tpu.vector_store %arg10[%c0_32, %c0_33, %c0_34], %45 {strides = array<i32>} : memref<2x18x128xf32, #tpu.memory_space<vmem>>, vector<2x1x128xf32>,
    %cst_35 = arith.constant 0.000000e+00 : f32
    %47 = vector.broadcast %cst_35 : f32 to vector<2x1x128xf32>
    %c0_36 = arith.constant 0 : index
    %c17 = arith.constant 17 : index
    %c0_37 = arith.constant 0 : index
    %48 = vector.load %arg10[%c0_36, %c17, %c0_37] : memref<2x18x128xf32, #tpu.memory_space<vmem>>, vector<2x1x128xf32>
    tpu.vector_store %arg10[%c0_36, %c17, %c0_37], %47 {strides = array<i32>} : memref<2x18x128xf32, #tpu.memory_space<vmem>>, vector<2x1x128xf32>,
    %49 = vector.shape_cast %44 : vector<32x128xf32> to vector<2x16x128xf32>
    %c0_38 = arith.constant 0 : index
    %c1_39 = arith.constant 1 : index
    %c0_40 = arith.constant 0 : index
    %50 = vector.load %arg10[%c0_38, %c1_39, %c0_40] : memref<2x18x128xf32, #tpu.memory_space<vmem>>, vector<2x16x128xf32>
    tpu.vector_store %arg10[%c0_38, %c1_39, %c0_40], %49 {strides = array<i32>} : memref<2x18x128xf32, #tpu.memory_space<vmem>>, vector<2x16x128xf32>,
    %c0_41 = arith.constant 0 : index
    %c0_42 = arith.constant 0 : index
    %c0_43 = arith.constant 0 : index
    %51 = vector.load %arg10[%c0_41, %c0_42, %c0_43] : memref<2x18x128xf32, #tpu.memory_space<vmem>>, vector<2x16x128xf32>
    %52 = vector.shape_cast %51 : vector<2x16x128xf32> to vector<32x128xf32>
    %c0_44 = arith.constant 0 : index
    %c1_45 = arith.constant 1 : index
    %c0_46 = arith.constant 0 : index
    %53 = vector.load %arg10[%c0_44, %c1_45, %c0_46] : memref<2x18x128xf32, #tpu.memory_space<vmem>>, vector<2x16x128xf32>
    %54 = vector.shape_cast %53 : vector<2x16x128xf32> to vector<32x128xf32>
    %c0_47 = arith.constant 0 : index
    %c2_48 = arith.constant 2 : index
    %c0_49 = arith.constant 0 : index
    %55 = vector.load %arg10[%c0_47, %c2_48, %c0_49] : memref<2x18x128xf32, #tpu.memory_space<vmem>>, vector<2x16x128xf32>
    %56 = vector.shape_cast %55 : vector<2x16x128xf32> to vector<32x128xf32>
    %57 = tpu.concatenate %52, %54, %56 in 1 : vector<32x128xf32>, vector<32x128xf32>, vector<32x128xf32> -> vector<32x384xf32>
    %58 = arith.truncf %57 : vector<32x384xf32> to vector<32x384xbf16>
    %c0_50 = arith.constant 0 : index
    %c0_51 = arith.constant 0 : index
    %59 = vector.load %arg2[%c0_50, %c0_51] : memref<384x128xbf16, #tpu.memory_space<vmem>>, vector<384x128xbf16>
    %cst_52 = arith.constant dense<0.000000e+00> : vector<32x128xf32>
    %60 = tpu.matmul %58, %59, %cst_52 {dimension_numbers = #tpu.dot_dimension_numbers<[1], [0], [0], [1], [0, 0, 1, 1], [], []>} : vector<32x384xbf16>, vector<384x128xbf16>, vector<32x128xf32> -> vector<32x128xf32>
    %cst_53 = arith.constant dense<0.000000e+00> : vector<128xf32>
    %61 = vector.multi_reduction <add>, %60, %cst_53 [0] : vector<32x128xf32> to vector<128xf32>
    %62 = vector.shape_cast %61 : vector<128xf32> to vector<1x128xf32>
    %63 = arith.mulf %60, %60 : vector<32x128xf32>
    %cst_54 = arith.constant dense<0.000000e+00> : vector<128xf32>
    %64 = vector.multi_reduction <add>, %63, %cst_54 [0] : vector<32x128xf32> to vector<128xf32>
    %65 = vector.shape_cast %64 : vector<128xf32> to vector<1x128xf32>
    %c0_55 = arith.constant 0 : index
    %c0_56 = arith.constant 0 : index
    %66 = vector.load %arg3[%c0_55, %c0_56] : memref<128x8xf32, #tpu.memory_space<vmem>>, vector<128x8xf32>
    %cst_57 = arith.constant dense<0.000000e+00> : vector<1x8xf32>
    %67 = tpu.matmul %62, %66, %cst_57 {dimension_numbers = #tpu.dot_dimension_numbers<[1], [0], [0], [1], [0, 0, 1, 1], [], []>} : vector<1x128xf32>, vector<128x8xf32>, vector<1x8xf32> -> vector<1x8xf32>
    %c0_58 = arith.constant 0 : index
    %c0_59 = arith.constant 0 : index
    %68 = vector.load %arg3[%c0_58, %c0_59] : memref<128x8xf32, #tpu.memory_space<vmem>>, vector<128x8xf32>
    %cst_60 = arith.constant dense<0.000000e+00> : vector<1x8xf32>
    %69 = tpu.matmul %65, %68, %cst_60 {dimension_numbers = #tpu.dot_dimension_numbers<[1], [0], [0], [1], [0, 0, 1, 1], [], []>} : vector<1x128xf32>, vector<128x8xf32>, vector<1x8xf32> -> vector<1x8xf32>
    %cst_61 = arith.constant 0.001953125 : f32
    %70 = vector.broadcast %cst_61 : f32 to vector<1x8xf32>
    %71 = arith.mulf %67, %70 : vector<1x8xf32>
    %cst_62 = arith.constant 0.001953125 : f32
    %72 = vector.broadcast %cst_62 : f32 to vector<1x8xf32>
    %73 = arith.mulf %69, %72 : vector<1x8xf32>
    %74 = arith.mulf %71, %71 : vector<1x8xf32>
    %75 = arith.subf %73, %74 : vector<1x8xf32>
    %cst_63 = arith.constant 0.000000e+00 : f32
    %76 = vector.broadcast %cst_63 : f32 to vector<1x8xf32>
    %77 = arith.maximumf %75, %76 : vector<1x8xf32>
    %cst_64 = arith.constant 9.99999974E-6 : f32
    %78 = vector.broadcast %cst_64 : f32 to vector<1x8xf32>
    %79 = arith.addf %77, %78 : vector<1x8xf32>
    %80 = math.rsqrt %79 : vector<1x8xf32>
    %c0_65 = arith.constant 0 : index
    %c0_66 = arith.constant 0 : index
    %81 = vector.load %arg7[%c0_65, %c0_66] : memref<1x8xf32, #tpu.memory_space<vmem>>, vector<1x8xf32>
    %82 = arith.mulf %81, %80 : vector<1x8xf32>
    %c0_67 = arith.constant 0 : index
    %c0_68 = arith.constant 0 : index
    %83 = vector.load %arg8[%c0_67, %c0_68] : memref<1x8xf32, #tpu.memory_space<vmem>>, vector<1x8xf32>
    %84 = arith.mulf %71, %82 : vector<1x8xf32>
    %85 = arith.subf %83, %84 : vector<1x8xf32>
    %c0_69 = arith.constant 0 : index
    %c0_70 = arith.constant 0 : index
    %86 = vector.load %arg4[%c0_69, %c0_70] : memref<8x128xf32, #tpu.memory_space<vmem>>, vector<8x128xf32>
    %cst_71 = arith.constant dense<0.000000e+00> : vector<1x128xf32>
    %87 = tpu.matmul %82, %86, %cst_71 {dimension_numbers = #tpu.dot_dimension_numbers<[1], [0], [0], [1], [0, 0, 1, 1], [], []>} : vector<1x8xf32>, vector<8x128xf32>, vector<1x128xf32> -> vector<1x128xf32>
    %c0_72 = arith.constant 0 : index
    %c0_73 = arith.constant 0 : index
    %88 = vector.load %arg4[%c0_72, %c0_73] : memref<8x128xf32, #tpu.memory_space<vmem>>, vector<8x128xf32>
    %cst_74 = arith.constant dense<0.000000e+00> : vector<1x128xf32>
    %89 = tpu.matmul %85, %88, %cst_74 {dimension_numbers = #tpu.dot_dimension_numbers<[1], [0], [0], [1], [0, 0, 1, 1], [], []>} : vector<1x8xf32>, vector<8x128xf32>, vector<1x128xf32> -> vector<1x128xf32>
    %90 = vector.broadcast %87 : vector<1x128xf32> to vector<32x128xf32>
    %91 = arith.mulf %60, %90 : vector<32x128xf32>
    %92 = vector.broadcast %89 : vector<1x128xf32> to vector<32x128xf32>
    %93 = arith.addf %91, %92 : vector<32x128xf32>
    %cst_75 = arith.constant 0.000000e+00 : f32
    %94 = vector.broadcast %cst_75 : f32 to vector<32x128xf32>
    %95 = arith.maximumf %93, %94 : vector<32x128xf32>
    %c0_76 = arith.constant 0 : index
    %c0_77 = arith.constant 0 : index
    %96 = vector.load %arg9[%c0_76, %c0_77] : memref<32x128xf32, #tpu.memory_space<vmem>>, vector<32x128xf32>
    tpu.vector_store %arg9[%c0_76, %c0_77], %95 {strides = array<i32>} : memref<32x128xf32, #tpu.memory_space<vmem>>, vector<32x128xf32>,
    return
  }
}

</mosaic_0001>

<llo_original>
// kernel: tpu_custom_call.1
$region0: #{tpu_custom_call.1}
  #allocation0 [shape = 'u32[]', space=smem, size = 0x4, offset = 0x4, fixed_abs, tag = 'smem constant byte address 0x4 - core index']
  #allocation1 [shape = 'u32[144,128]{1,0:T(1,128)}', space=vmem, size = 0x12000, scoped, tag = 'internal scratch']
  #allocation2 [shape = 'f32[2,18,128]{2,1,0:T(8,128)}', space=vmem, size = 0x6000, scoped, tag = 'scratch operand']
  %s0 = inlined_call_operand.vmem [shape: f32[2,18,64], index: 0, kind: input, shape index: {}]
  %s1 = inlined_call_operand.hbm [shape: bf16[192,128], index: 1, kind: input, shape index: {}]
  %s2 = inlined_call_operand.vmem [shape: bf16[384,128], index: 2, kind: input, shape index: {}]
  %s3 = inlined_call_operand.vmem [shape: f32[128,8], index: 3, kind: input, shape index: {}]
  %s4 = inlined_call_operand.vmem [shape: f32[8,128], index: 4, kind: input, shape index: {}]
  %s5 = inlined_call_operand.vmem [shape: f32[1,8], index: 5, kind: input, shape index: {}]
  %s6 = inlined_call_operand.vmem [shape: f32[1,8], index: 6, kind: input, shape index: {}]
  %s7 = inlined_call_operand.vmem [shape: f32[1,8], index: 7, kind: input, shape index: {}]
  %s8 = inlined_call_operand.vmem [shape: f32[1,8], index: 8, kind: input, shape index: {}]
  %s9 = inlined_call_operand.hbm [shape: f32[32,128], index: 9, kind: output, shape index: {}]
  %s10 = sld [smem:[#allocation0]]
  $region50: #{tpu_custom_call.1} parent=0
    _
  %s12 = ssub.s32 1, %s10
  %s13 = scalar_select 0, %s12, %s10
  $region1: #{tpu_custom_call.1} parent=0
    #allocation3 [shape = 'u8[49152]{0}', space=vmem, size = 0xc000, scoped, tag = 'input window, operand 1, single buffered']
    #allocation4 [shape = 's32[1]{0}', space=sflag, size = 0x4, scoped, tag = 'scoped memory for tpu_custom_call.1']
    #allocation5 [shape = 's32[1]{0}', space=sflag, size = 0x4, scoped, tag = 'scoped memory for tpu_custom_call.1']
    #allocation6 [shape = 'u8[16384]{0}', space=vmem, size = 0x4000, scoped, tag = 'output window, operand 0, single buffered']
    %14 = vsyncpa [#allocation4], 0
    %15 = vsyncpa [#allocation5], 0
    // Predicated region
    $region2: #{tpu_custom_call.1} parent=1 // pred_check
      _
    $region3: #{tpu_custom_call.1} parent=1 // pred_check_branch
      %17 = sbr.rel (0) target = $region5
    $region4: #{tpu_custom_call.1} parent=1 // pred_region
      _
    $region5: #{tpu_custom_call.1} parent=1 // pred_fallthru
      _
    // Predicated region
    $region6: #{tpu_custom_call.1} parent=1 // pred_check
      _
    $region7: #{tpu_custom_call.1} parent=1 // pred_check_branch
      %19 = sbr.rel (0) target = $region9
    $region8: #{tpu_custom_call.1} parent=1 // pred_region
      %s21 = ssub.s32 1536, 1536
      %22 = vsyncadd [#allocation4], %s21
      %s23 = sshll.u32 [#allocation3], 4
      %s24 = int_to_ptr.vmem [resolvable:$true] %s23
      %29 = dma.hbm_to_vmem [thread:$0]  %s1, 1536, %s24, [#allocation4], 64, 64, 4
    $region9: #{tpu_custom_call.1} parent=1 // pred_fallthru
      _
    // Predicated region
    $region10: #{tpu_custom_call.1} parent=1 // pred_check
      _
    $region11: #{tpu_custom_call.1} parent=1 // pred_check_branch
      %31 = sbr.rel (0) target = $region13
    $region12: #{tpu_custom_call.1} parent=1 // pred_region
      _
    $region13: #{tpu_custom_call.1} parent=1 // pred_fallthru
      _
    // Predicated region
    $region14: #{tpu_custom_call.1} parent=1 // pred_check
      _
    $region15: #{tpu_custom_call.1} parent=1 // pred_check_branch
      %33 = sbr.rel (0) target = $region17
    $region16: #{tpu_custom_call.1} parent=1 // pred_region
      _
    $region17: #{tpu_custom_call.1} parent=1 // pred_fallthru
      _
    // Predicated region
    $region18: #{tpu_custom_call.1} parent=1 // pred_check
      _
    $region19: #{tpu_custom_call.1} parent=1 // pred_check_branch
      %35 = sbr.rel (0) target = $region21
    $region20: #{tpu_custom_call.1} parent=1 // pred_region
      _
    $region21: #{tpu_custom_call.1} parent=1 // pred_fallthru
      _
    // Predicated region
    $region22: #{tpu_custom_call.1} parent=1 // pred_check
      _
    $region23: #{tpu_custom_call.1} parent=1 // pred_check_branch
      %37 = sbr.rel (0) target = $region25
    $region24: #{tpu_custom_call.1} parent=1 // pred_region
      _
    $region25: #{tpu_custom_call.1} parent=1 // pred_fallthru
      _
    // Predicated region
    $region26: #{tpu_custom_call.1} parent=1 // pred_check
      _
    $region27: #{tpu_custom_call.1} parent=1 // pred_check_branch
      %39 = sbr.rel (0) target = $region29
    $region28: #{tpu_custom_call.1} parent=1 // pred_region
      _
    $region29: #{tpu_custom_call.1} parent=1 // pred_fallthru
      _
    // Predicated region
    $region30: #{tpu_custom_call.1} parent=1 // pred_check
      _
    $region31: #{tpu_custom_call.1} parent=1 // pred_check_branch
      %41 = sbr.rel (0) target = $region33
    $region32: #{tpu_custom_call.1} parent=1 // pred_region
      _
    $region33: #{tpu_custom_call.1} parent=1 // pred_fallthru
      _
    // Predicated region
    $region34: #{tpu_custom_call.1} parent=1 // pred_check
      _
    $region35: #{tpu_custom_call.1} parent=1 // pred_check_branch
      %43 = sbr.rel (0) target = $region37
    $region36: #{tpu_custom_call.1} parent=1 // pred_region
      _
    $region37: #{tpu_custom_call.1} parent=1 // pred_fallthru
      _
    // Predicated region
    $region38: #{tpu_custom_call.1} parent=1 // pred_check
      _
    $region39: #{tpu_custom_call.1} parent=1 // pred_check_branch
      %45 = sbr.rel (0) target = $region41
    $region40: #{tpu_custom_call.1} parent=1 // pred_region
      %46 = dma.done [#allocation4], 1536
    $region41: #{tpu_custom_call.1} parent=1 // pred_fallthru
      _
    %v48 = vld [vmem:[%s0] sm:$0xff]
    %v49 = vld [vmem:[%s0 + $0x8] sm:$0xff]
    %v50 = vld [vmem:[%s0 + $0x18] sm:$0xff]
    %v51 = vld [vmem:[%s0 + $0x20] sm:$0xff]
    %v52 = vld [vmem:[%s0 + $0x1] sm:$0xff]
    %v53 = vld [vmem:[%s0 + $0x9] sm:$0xff]
    %v54 = vld [vmem:[%s0 + $0x19] sm:$0xff]
    %v55 = vld [vmem:[%s0 + $0x21] sm:$0xff]
    %v56 = vld [vmem:[%s0 + $0x2] sm:$0xff]
    %v57 = vld [vmem:[%s0 + $0xa] sm:$0xff]
    %v58 = vld [vmem:[%s0 + $0x1a] sm:$0xff]
    %v59 = vld [vmem:[%s0 + $0x22] sm:$0xff]
    %64 = vrot.lane.b32.xlu0 %v52, 64
    %v65 = vpop.permute.xlu0 %64
    %66 = vrot.lane.b32.xlu0 %v53, 64
    %v67 = vpop.permute.xlu0 %66
    %68 = vrot.lane.b32.xlu0 %v54, 64
    %v69 = vpop.permute.xlu0 %68
    %70 = vrot.lane.b32.xlu0 %v55, 64
    %v71 = vpop.permute.xlu0 %70
    %vm76 = vcmask 523264
    %v77 = vsel %vm76, %v48, %v65
    %v78 = vsel %vm76, %v49, %v67
    %v79 = vsel %vm76, %v50, %v69
    %v80 = vsel %vm76, %v51, %v71
    %v81 = vpack.c.bf16 %v78, %v77
    %v82 = vpack.c.bf16 %v57, %v56
    %v83 = vpack.c.bf16 %v80, %v79
    %v84 = vpack.c.bf16 %v59, %v58
    %v85 = vld [vmem:[#allocation3] sm:$0xf]
    %v86 = vld [vmem:[#allocation3 + $0x4] sm:$0xf]
    %v87 = vld [vmem:[#allocation3 + $0x8] sm:$0xf]
    %v88 = vld [vmem:[#allocation3 + $0xc] sm:$0xf]
    %v89 = vld [vmem:[#allocation3 + $0x10] sm:$0xf]
    %v90 = vld [vmem:[#allocation3 + $0x14] sm:$0xf]
    %v91 = vld [vmem:[#allocation3 + $0x18] sm:$0xf]
    %v92 = vld [vmem:[#allocation3 + $0x1c] sm:$0xf]
    %v93 = vld [vmem:[#allocation3 + $0x20] sm:$0xf]
    %v94 = vld [vmem:[#allocation3 + $0x24] sm:$0xf]
    %v95 = vld [vmem:[#allocation3 + $0x28] sm:$0xf]
    %v96 = vld [vmem:[#allocation3 + $0x2c] sm:$0xf]
    %v97 = vld [vmem:[#allocation3 + $0x30] sm:$0xf]
    %v98 = vld [vmem:[#allocation3 + $0x34] sm:$0xf]
    %v99 = vld [vmem:[#allocation3 + $0x38] sm:$0xf]
    %v100 = vld [vmem:[#allocation3 + $0x3c] sm:$0xf]
    %v101 = vld [vmem:[#allocation3 + $0x40] sm:$0xf]
    %v102 = vld [vmem:[#allocation3 + $0x44] sm:$0xf]
    %v103 = vld [vmem:[#allocation3 + $0x48] sm:$0xf]
    %v104 = vld [vmem:[#allocation3 + $0x4c] sm:$0xf]
    %v105 = vld [vmem:[#allocation3 + $0x50] sm:$0xf]
    %v106 = vld [vmem:[#allocation3 + $0x54] sm:$0xf]
    %v107 = vld [vmem:[#allocation3 + $0x58] sm:$0xf]
    %v108 = vld [vmem:[#allocation3 + $0x5c] sm:$0xf]
    %v133 = vunpack.c.l.b16 %v85
    %v134 = vunpack.c.l.b16 %v86
    %v135 = vunpack.c.l.b16 %v87
    %v136 = vunpack.c.l.b16 %v88
    %v137 = vunpack.c.l.b16 %v89
    %v138 = vunpack.c.l.b16 %v90
    %v139 = vunpack.c.l.b16 %v91
    %v140 = vunpack.c.l.b16 %v92
    %v141 = vunpack.c.l.b16 %v93
    %v142 = vunpack.c.l.b16 %v94
    %v143 = vunpack.c.l.b16 %v95
    %v144 = vunpack.c.l.b16 %v96
    %v145 = vunpack.c.l.b16 %v97
    %v146 = vunpack.c.l.b16 %v98
    %v147 = vunpack.c.l.b16 %v99
    %v148 = vunpack.c.l.b16 %v100
    %v149 = vunpack.c.l.b16 %v101
    %v150 = vunpack.c.l.b16 %v102
    %v151 = vunpack.c.l.b16 %v103
    %v152 = vunpack.c.l.b16 %v104
    %v153 = vunpack.c.l.b16 %v105
    %v154 = vunpack.c.l.b16 %v106
    %v155 = vunpack.c.l.b16 %v107
    %v156 = vunpack.c.l.b16 %v108
    %v157 = vpack.c.b16 %v134, %v133
    %v158 = vpack.c.b16 %v136, %v135
    %v159 = vpack.c.b16 %v138, %v137
    %v160 = vpack.c.b16 %v140, %v139
    %v161 = vpack.c.b16 %v142, %v141
    %v162 = vpack.c.b16 %v144, %v143
    %v163 = vpack.c.b16 %v146, %v145
    %v164 = vpack.c.b16 %v148, %v147
    %v165 = vpack.c.b16 %v150, %v149
    %v166 = vpack.c.b16 %v152, %v151
    %v167 = vpack.c.b16 %v154, %v153
    %v168 = vpack.c.b16 %v156, %v155
    %v182 = vsel %vm76, %v82, 0
    %v185 = vsel %vm76, %v84, 0
    %187 = vmatprep.subr.bf16.mxu0 0
    %188 = vmatpush1.bf16.msra.mxu0 %v157
    %189 = vmatprep.subr.bf16.mxu0 0
    %190 = vmatpush1.bf16.msra.mxu0 %v158
    %191 = vmatprep.subr.bf16.mxu0 0
    %192 = vmatpush1.bf16.msra.mxu0 %v159
    %193 = vmatprep.subr.bf16.mxu0 0
    %194 = vmatpush1.bf16.msra.mxu0 %v160
    %195 = vmatprep.subr.bf16.mxu0 0
    %196 = vmatpush1.bf16.msra.mxu0 %v161
    %197 = vmatprep.subr.bf16.mxu0 0
    %198 = vmatpush1.bf16.msra.mxu0 %v162
    %199 = vmatprep.subr.bf16.mxu0 0
    %200 = vmatpush1.bf16.msra.mxu0 %v163
    %201 = vmatprep.subr.bf16.mxu0 0
    %202 = vmatpush1.bf16.msra.mxu0 %v164
    %203 = vmatprep.subr.bf16.mxu0 0
    %204 = vmatpush1.bf16.msra.mxu0 %v165
    %205 = vmatprep.subr.bf16.mxu0 0
    %206 = vmatpush1.bf16.msra.mxu0 %v166
    %207 = vmatprep.subr.bf16.mxu0 0
    %208 = vmatpush1.bf16.msra.mxu0 %v167
    %209 = vmatprep.subr.bf16.mxu0 0
    %210 = vmatpush1.bf16.msra.mxu0 %v168
    %211 = vmatprep.subr.bf16.mxu0 0
    %212 = vmatpush1.bf16.msra.mxu0 0
    %213 = vmatprep.subr.bf16.mxu0 0
    %214 = vmatpush1.bf16.msra.mxu0 0
    %215 = vmatprep.subr.bf16.mxu0 0
    %216 = vmatpush1.bf16.msra.mxu0 0
    %217 = vmatprep.subr.bf16.mxu0 0
    %218 = vmatpush1.bf16.msra.mxu0 0
    %219 = vmatprep.mubr.bf16.mxu0 %v182
    %220 = vmatmul.mubr.bf16.gmra.mrb[0].mxu0 %v81
    %v221 = vpop.f32.mrb[0].mxu0
    %v222 = vadd.f32 0.0, %v221
    %v223 = vpop.f32.mrb[0].mxu0
    %v224 = vpop.f32.mrb[0].mxu0
    %v225 = vadd.f32 0.0, %v224
    %v226 = vpop.f32.mrb[0].mxu0
    %227 = vmatprep.mubr.bf16.mxu0 %v185
    %228 = vmatmul.mubr.bf16.gmra.mrb[0].mxu0 %v83
    %v229 = vpop.f32.mrb[0].mxu0
    %v230 = vadd.f32 0.0, %v229
    %v231 = vpop.f32.mrb[0].mxu0
    %v232 = vpop.f32.mrb[0].mxu0
    %v233 = vadd.f32 0.0, %v232
    %v234 = vpop.f32.mrb[0].mxu0
    %235 = vdwg.mxu0
    %v236 = vadd.f32 %v222, %v225
    %v237 = vadd.f32 %v236, %v230
    %v238 = vadd.f32 %v237, %v233
    %v239 = vrot.slane %v238, 4
    %v240 = vadd.f32 %v238, %v239
    %v241 = vrot.slane %v240, 2
    %v242 = vadd.f32 %v240, %v241
    %v243 = vrot.slane %v242, 1
    %v244 = vadd.f32 %v242, %v243
    %v245 = vmul.f32 %v222, %v222
    %v246 = vmul.f32 %v225, %v225
    %v247 = vmul.f32 %v230, %v230
    %v248 = vmul.f32 %v233, %v233
    %v249 = vadd.f32 %v245, %v246
    %v250 = vadd.f32 %v249, %v247
    %v251 = vadd.f32 %v250, %v248
    %v252 = vrot.slane %v251, 4
    %v253 = vadd.f32 %v251, %v252
    %v254 = vrot.slane %v253, 2
    %v255 = vadd.f32 %v253, %v254
    %v256 = vrot.slane %v255, 1
    %v257 = vadd.f32 %v255, %v256
    %v258 = vld [vmem:[%s3] sm:$0xff]
    %v259 = vld [vmem:[%s3 + $0x8] sm:$0xff]
    %v260 = vld [vmem:[%s3 + $0x10] sm:$0xff]
    %v261 = vld [vmem:[%s3 + $0x18] sm:$0xff]
    %v262 = vld [vmem:[%s3 + $0x20] sm:$0xff]
    %v263 = vld [vmem:[%s3 + $0x28] sm:$0xff]
    %v264 = vld [vmem:[%s3 + $0x30] sm:$0xff]
    %v265 = vld [vmem:[%s3 + $0x38] sm:$0xff]
    %v266 = vld [vmem:[%s3 + $0x40] sm:$0xff]
    %v267 = vld [vmem:[%s3 + $0x48] sm:$0xff]
    %v268 = vld [vmem:[%s3 + $0x50] sm:$0xff]
    %v269 = vld [vmem:[%s3 + $0x58] sm:$0xff]
    %v270 = vld [vmem:[%s3 + $0x60] sm:$0xff]
    %v271 = vld [vmem:[%s3 + $0x68] sm:$0xff]
    %v272 = vld [vmem:[%s3 + $0x70] sm:$0xff]
    %v273 = vld [vmem:[%s3 + $0x78] sm:$0xff]
    %274 = vmatprep.subr.mxu0 0.0
    %275 = vmatpush1.msra.mxu0 %v258
    %276 = vmatprep.subr.mxu0 0.0
    %277 = vmatpush1.msra.mxu0 %v259
    %278 = vmatprep.subr.mxu0 0.0
    %279 = vmatpush1.msra.mxu0 %v260
    %280 = vmatprep.subr.mxu0 0.0
    %281 = vmatpush1.msra.mxu0 %v261
    %282 = vmatprep.subr.mxu0 0.0
    %283 = vmatpush1.msra.mxu0 %v262
    %284 = vmatprep.subr.mxu0 0.0
    %285 = vmatpush1.msra.mxu0 %v263
    %286 = vmatprep.subr.mxu0 0.0
    %287 = vmatpush1.msra.mxu0 %v264
    %288 = vmatprep.subr.mxu0 0.0
    %289 = vmatpush1.msra.mxu0 %v265
    %290 = vmatprep.subr.mxu0 0.0
    %291 = vmatpush1.msra.mxu0 %v266
    %292 = vmatprep.subr.mxu0 0.0
    %293 = vmatpush1.msra.mxu0 %v267
    %294 = vmatprep.subr.mxu0 0.0
    %295 = vmatpush1.msra.mxu0 %v268
    %296 = vmatprep.subr.mxu0 0.0
    %297 = vmatpush1.msra.mxu0 %v269
    %298 = vmatprep.subr.mxu0 0.0
    %299 = vmatpush1.msra.mxu0 %v270
    %300 = vmatprep.subr.mxu0 0.0
    %301 = vmatpush1.msra.mxu0 %v271
    %302 = vmatprep.subr.mxu0 0.0
    %303 = vmatpush1.msra.mxu0 %v272
    %304 = vmatprep.subr.mxu0 0.0
    %305 = vmatpush1.msra.mxu0 %v273
    %306 = vmatprep.subr.mxu0 0.0
    %307 = vmatpush1.msra.mxu0 0.0
    %308 = vmatprep.subr.mxu0 0.0
    %309 = vmatpush1.msra.mxu0 0.0
    %310 = vmatprep.subr.mxu0 0.0
    %311 = vmatpush1.msra.mxu0 0.0
    %312 = vmatprep.subr.mxu0 0.0
    %313 = vmatpush1.msra.mxu0 0.0
    %314 = vmatprep.subr.mxu0 0.0
    %315 = vmatpush1.msra.mxu0 0.0
    %316 = vmatprep.subr.mxu0 0.0
    %317 = vmatpush1.msra.mxu0 0.0
    %318 = vmatprep.subr.mxu0 0.0
    %319 = vmatpush1.msra.mxu0 0.0
    %320 = vmatprep.subr.mxu0 0.0
    %321 = vmatpush1.msra.mxu0 0.0
    %322 = vmatprep.subr.mxu0 0.0
    %323 = vmatpush1.msra.mxu0 0.0
    %324 = vmatprep.subr.mxu0 0.0
    %325 = vmatpush1.msra.mxu0 0.0
    %326 = vmatprep.subr.mxu0 0.0
    %327 = vmatpush1.msra.mxu0 0.0
    %328 = vmatprep.subr.mxu0 0.0
    %329 = vmatpush1.msra.mxu0 0.0
    %330 = vmatprep.subr.mxu0 0.0
    %331 = vmatpush1.msra.mxu0 0.0
    %332 = vmatprep.subr.mxu0 0.0
    %333 = vmatpush1.msra.mxu0 0.0
    %334 = vmatprep.subr.mxu0 0.0
    %335 = vmatpush1.msra.mxu0 0.0
    %336 = vmatprep.subr.mxu0 0.0
    %337 = vmatpush1.msra.mxu0 0.0
    %338 = vmatprep.mubr.f32.mxu0 0.0
    %339 = vmatmul.mubr.f32.gmra.mrb[0].mxu0 %v244
    %v340 = vpop.f32.mrb[0].mxu0
    %v341 = vadd.f32 0.0, %v340
    %v342 = vpop.f32.mrb[0].mxu0
    %343 = vdwg.mxu0
    %344 = vmatprep.subr.mxu0 0.0
    %345 = vmatpush1.msra.mxu0 %v258
    %346 = vmatprep.subr.mxu0 0.0
    %347 = vmatpush1.msra.mxu0 %v259
    %348 = vmatprep.subr.mxu0 0.0
    %349 = vmatpush1.msra.mxu0 %v260
    %350 = vmatprep.subr.mxu0 0.0
    %351 = vmatpush1.msra.mxu0 %v261
    %352 = vmatprep.subr.mxu0 0.0
    %353 = vmatpush1.msra.mxu0 %v262
    %354 = vmatprep.subr.mxu0 0.0
    %355 = vmatpush1.msra.mxu0 %v263
    %356 = vmatprep.subr.mxu0 0.0
    %357 = vmatpush1.msra.mxu0 %v264
    %358 = vmatprep.subr.mxu0 0.0
    %359 = vmatpush1.msra.mxu0 %v265
    %360 = vmatprep.subr.mxu0 0.0
    %361 = vmatpush1.msra.mxu0 %v266
    %362 = vmatprep.subr.mxu0 0.0
    %363 = vmatpush1.msra.mxu0 %v267
    %364 = vmatprep.subr.mxu0 0.0
    %365 = vmatpush1.msra.mxu0 %v268
    %366 = vmatprep.subr.mxu0 0.0
    %367 = vmatpush1.msra.mxu0 %v269
    %368 = vmatprep.subr.mxu0 0.0
    %369 = vmatpush1.msra.mxu0 %v270
    %370 = vmatprep.subr.mxu0 0.0
    %371 = vmatpush1.msra.mxu0 %v271
    %372 = vmatprep.subr.mxu0 0.0
    %373 = vmatpush1.msra.mxu0 %v272
    %374 = vmatprep.subr.mxu0 0.0
    %375 = vmatpush1.msra.mxu0 %v273
    %376 = vmatprep.subr.mxu0 0.0
    %377 = vmatpush1.msra.mxu0 0.0
    %378 = vmatprep.subr.mxu0 0.0
    %379 = vmatpush1.msra.mxu0 0.0
    %380 = vmatprep.subr.mxu0 0.0
    %381 = vmatpush1.msra.mxu0 0.0
    %382 = vmatprep.subr.mxu0 0.0
    %383 = vmatpush1.msra.mxu0 0.0
    %384 = vmatprep.subr.mxu0 0.0
    %385 = vmatpush1.msra.mxu0 0.0
    %386 = vmatprep.subr.mxu0 0.0
    %387 = vmatpush1.msra.mxu0 0.0
    %388 = vmatprep.subr.mxu0 0.0
    %389 = vmatpush1.msra.mxu0 0.0
    %390 = vmatprep.subr.mxu0 0.0
    %391 = vmatpush1.msra.mxu0 0.0
    %392 = vmatprep.subr.mxu0 0.0
    %393 = vmatpush1.msra.mxu0 0.0
    %394 = vmatprep.subr.mxu0 0.0
    %395 = vmatpush1.msra.mxu0 0.0
    %396 = vmatprep.subr.mxu0 0.0
    %397 = vmatpush1.msra.mxu0 0.0
    %398 = vmatprep.subr.mxu0 0.0
    %399 = vmatpush1.msra.mxu0 0.0
    %400 = vmatprep.subr.mxu0 0.0
    %401 = vmatpush1.msra.mxu0 0.0
    %402 = vmatprep.subr.mxu0 0.0
    %403 = vmatpush1.msra.mxu0 0.0
    %404 = vmatprep.subr.mxu0 0.0
    %405 = vmatpush1.msra.mxu0 0.0
    %406 = vmatprep.subr.mxu0 0.0
    %407 = vmatpush1.msra.mxu0 0.0
    %408 = vmatprep.mubr.f32.mxu0 0.0
    %409 = vmatmul.mubr.f32.gmra.mrb[0].mxu0 %v257
    %v410 = vpop.f32.mrb[0].mxu0
    %v411 = vadd.f32 0.0, %v410
    %v412 = vpop.f32.mrb[0].mxu0
    %413 = vdwg.mxu0
    %v414 = vmul.f32 %v341, 0.001953125
    %v415 = vmul.f32 %v411, 0.001953125
    %v416 = vmul.f32 %v414, %v414
    %v417 = vsub.f32 %v415, %v416
    %v418 = vmax.f32 %v417, 0.0
    %v419 = vadd.f32 %v418, 1e-05
    %v420 = vrsqrt.pop %v419
    %v421 = vld [vmem:[%s5] sm:$0x1]
    %v422 = vmul.f32 %v421, %v420
    %v423 = vld [vmem:[%s6] sm:$0x1]
    %v424 = vmul.f32 %v414, %v422
    %v425 = vsub.f32 %v423, %v424
    %v426 = vld [vmem:[%s4] sm:$0xff]
    %vm427 = vcmask 64512
    %v429 = vsel %vm427, %v422, 0
    %431 = vmatprep.subr.mxu0 0.0
    %432 = vmatpush1.msra.mxu0 %v426
    %433 = vmatprep.subr.mxu0 0.0
    %434 = vmatpush1.msra.mxu0 0.0
    %435 = vmatprep.subr.mxu0 0.0
    %436 = vmatpush1.msra.mxu0 0.0
    %437 = vmatprep.subr.mxu0 0.0
    %438 = vmatpush1.msra.mxu0 0.0
    %439 = vmatprep.subr.mxu0 0.0
    %440 = vmatpush1.msra.mxu0 0.0
    %441 = vmatprep.subr.mxu0 0.0
    %442 = vmatpush1.msra.mxu0 0.0
    %443 = vmatprep.subr.mxu0 0.0
    %444 = vmatpush1.msra.mxu0 0.0
    %445 = vmatprep.subr.mxu0 0.0
    %446 = vmatpush1.msra.mxu0 0.0
    %447 = vmatprep.subr.mxu0 0.0
    %448 = vmatpush1.msra.mxu0 0.0
    %449 = vmatprep.subr.mxu0 0.0
    %450 = vmatpush1.msra.mxu0 0.0
    %451 = vmatprep.subr.mxu0 0.0
    %452 = vmatpush1.msra.mxu0 0.0
    %453 = vmatprep.subr.mxu0 0.0
    %454 = vmatpush1.msra.mxu0 0.0
    %455 = vmatprep.subr.mxu0 0.0
    %456 = vmatpush1.msra.mxu0 0.0
    %457 = vmatprep.subr.mxu0 0.0
    %458 = vmatpush1.msra.mxu0 0.0
    %459 = vmatprep.subr.mxu0 0.0
    %460 = vmatpush1.msra.mxu0 0.0
    %461 = vmatprep.subr.mxu0 0.0
    %462 = vmatpush1.msra.mxu0 0.0
    %463 = vmatprep.subr.mxu0 0.0
    %464 = vmatpush1.msra.mxu0 0.0
    %465 = vmatprep.subr.mxu0 0.0
    %466 = vmatpush1.msra.mxu0 0.0
    %467 = vmatprep.subr.mxu0 0.0
    %468 = vmatpush1.msra.mxu0 0.0
    %469 = vmatprep.subr.mxu0 0.0
    %470 = vmatpush1.msra.mxu0 0.0
    %471 = vmatprep.subr.mxu0 0.0
    %472 = vmatpush1.msra.mxu0 0.0
    %473 = vmatprep.subr.mxu0 0.0
    %474 = vmatpush1.msra.mxu0 0.0
    %475 = vmatprep.subr.mxu0 0.0
    %476 = vmatpush1.msra.mxu0 0.0
    %477 = vmatprep.subr.mxu0 0.0
    %478 = vmatpush1.msra.mxu0 0.0
    %479 = vmatprep.subr.mxu0 0.0
    %480 = vmatpush1.msra.mxu0 0.0
    %481 = vmatprep.subr.mxu0 0.0
    %482 = vmatpush1.msra.mxu0 0.0
    %483 = vmatprep.subr.mxu0 0.0
    %484 = vmatpush1.msra.mxu0 0.0
    %485 = vmatprep.subr.mxu0 0.0
    %486 = vmatpush1.msra.mxu0 0.0
    %487 = vmatprep.subr.mxu0 0.0
    %488 = vmatpush1.msra.mxu0 0.0
    %489 = vmatprep.subr.mxu0 0.0
    %490 = vmatpush1.msra.mxu0 0.0
    %491 = vmatprep.subr.mxu0 0.0
    %492 = vmatpush1.msra.mxu0 0.0
    %493 = vmatprep.subr.mxu0 0.0
    %494 = vmatpush1.msra.mxu0 0.0
    %495 = vmatprep.mubr.f32.mxu0 0.0
    %496 = vmatmul.mubr.f32.gmra.mrb[0].mxu0 %v429
    %v497 = vpop.f32.mrb[0].mxu0
    %v498 = vadd.f32 0.0, %v497
    %v499 = vpop.f32.mrb[0].mxu0
    %500 = vdwg.mxu0
    %v502 = vsel %vm427, %v425, 0
    %504 = vmatprep.subr.mxu0 0.0
    %505 = vmatpush1.msra.mxu0 %v426
    %506 = vmatprep.subr.mxu0 0.0
    %507 = vmatpush1.msra.mxu0 0.0
    %508 = vmatprep.subr.mxu0 0.0
    %509 = vmatpush1.msra.mxu0 0.0
    %510 = vmatprep.subr.mxu0 0.0
    %511 = vmatpush1.msra.mxu0 0.0
    %512 = vmatprep.subr.mxu0 0.0
    %513 = vmatpush1.msra.mxu0 0.0
    %514 = vmatprep.subr.mxu0 0.0
    %515 = vmatpush1.msra.mxu0 0.0
    %516 = vmatprep.subr.mxu0 0.0
    %517 = vmatpush1.msra.mxu0 0.0
    %518 = vmatprep.subr.mxu0 0.0
    %519 = vmatpush1.msra.mxu0 0.0
    %520 = vmatprep.subr.mxu0 0.0
    %521 = vmatpush1.msra.mxu0 0.0
    %522 = vmatprep.subr.mxu0 0.0
    %523 = vmatpush1.msra.mxu0 0.0
    %524 = vmatprep.subr.mxu0 0.0
    %525 = vmatpush1.msra.mxu0 0.0
    %526 = vmatprep.subr.mxu0 0.0
    %527 = vmatpush1.msra.mxu0 0.0
    %528 = vmatprep.subr.mxu0 0.0
    %529 = vmatpush1.msra.mxu0 0.0
    %530 = vmatprep.subr.mxu0 0.0
    %531 = vmatpush1.msra.mxu0 0.0
    %532 = vmatprep.subr.mxu0 0.0
    %533 = vmatpush1.msra.mxu0 0.0
    %534 = vmatprep.subr.mxu0 0.0
    %535 = vmatpush1.msra.mxu0 0.0
    %536 = vmatprep.subr.mxu0 0.0
    %537 = vmatpush1.msra.mxu0 0.0
    %538 = vmatprep.subr.mxu0 0.0
    %539 = vmatpush1.msra.mxu0 0.0
    %540 = vmatprep.subr.mxu0 0.0
    %541 = vmatpush1.msra.mxu0 0.0
    %542 = vmatprep.subr.mxu0 0.0
    %543 = vmatpush1.msra.mxu0 0.0
    %544 = vmatprep.subr.mxu0 0.0
    %545 = vmatpush1.msra.mxu0 0.0
    %546 = vmatprep.subr.mxu0 0.0
    %547 = vmatpush1.msra.mxu0 0.0
    %548 = vmatprep.subr.mxu0 0.0
    %549 = vmatpush1.msra.mxu0 0.0
    %550 = vmatprep.subr.mxu0 0.0
    %551 = vmatpush1.msra.mxu0 0.0
    %552 = vmatprep.subr.mxu0 0.0
    %553 = vmatpush1.msra.mxu0 0.0
    %554 = vmatprep.subr.mxu0 0.0
    %555 = vmatpush1.msra.mxu0 0.0
    %556 = vmatprep.subr.mxu0 0.0
    %557 = vmatpush1.msra.mxu0 0.0
    %558 = vmatprep.subr.mxu0 0.0
    %559 = vmatpush1.msra.mxu0 0.0
    %560 = vmatprep.subr.mxu0 0.0
    %561 = vmatpush1.msra.mxu0 0.0
    %562 = vmatprep.subr.mxu0 0.0
    %563 = vmatpush1.msra.mxu0 0.0
    %564 = vmatprep.subr.mxu0 0.0
    %565 = vmatpush1.msra.mxu0 0.0
    %566 = vmatprep.subr.mxu0 0.0
    %567 = vmatpush1.msra.mxu0 0.0
    %568 = vmatprep.mubr.f32.mxu0 0.0
    %569 = vmatmul.mubr.f32.gmra.mrb[0].mxu0 %v502
    %v570 = vpop.f32.mrb[0].mxu0
    %v571 = vadd.f32 0.0, %v570
    %v572 = vpop.f32.mrb[0].mxu0
    %573 = vdwg.mxu0
    %v574 = vlaneseq
    %v575 = vshrl.u32 %v574, 7
    %v576 = vsub.s32 0, %v575
    %v577 = vrot.slane %v498, %v576
    %v578 = vmul.f32 %v222, %v577
    %v579 = vmul.f32 %v225, %v577
    %v580 = vmul.f32 %v230, %v577
    %v581 = vmul.f32 %v233, %v577
    %v582 = vlaneseq
    %v583 = vshrl.u32 %v582, 7
    %v584 = vsub.s32 0, %v583
    %v585 = vrot.slane %v571, %v584
    %v586 = vadd.f32 %v578, %v585
    %v587 = vadd.f32 %v579, %v585
    %v588 = vadd.f32 %v580, %v585
    %v589 = vadd.f32 %v581, %v585
    %v590 = vmax.f32 %v586, 0.0
    %v591 = vmax.f32 %v587, 0.0
    %v592 = vmax.f32 %v588, 0.0
    %v593 = vmax.f32 %v589, 0.0
    %594 = vst [vmem:[#allocation2] sm:$0x1] 0.0
    %595 = vst [vmem:[#allocation2 + $0x18] sm:$0x1] 0.0
    %596 = vst [vmem:[#allocation2 + $0x11] sm:$0x1] 0.0
    %597 = vst [vmem:[#allocation2 + $0x29] sm:$0x1] 0.0
    %598 = vst [vmem:[#allocation2 + $0x1] sm:$0xff] %v590
    %599 = vst [vmem:[#allocation2 + $0x9] sm:$0xff] %v591
    %600 = vst [vmem:[#allocation2 + $0x19] sm:$0xff] %v592
    %601 = vst [vmem:[#allocation2 + $0x21] sm:$0xff] %v593
    %v602 = vld [vmem:[#allocation2] sm:$0xff]
    %v603 = vld [vmem:[#allocation2 + $0x8] sm:$0xff]
    %v604 = vld [vmem:[#allocation2 + $0x18] sm:$0xff]
    %v605 = vld [vmem:[#allocation2 + $0x20] sm:$0xff]
    %v606 = vld [vmem:[#allocation2 + $0x1] sm:$0xff]
    %v607 = vld [vmem:[#allocation2 + $0x9] sm:$0xff]
    %v608 = vld [vmem:[#allocation2 + $0x19] sm:$0xff]
    %v609 = vld [vmem:[#allocation2 + $0x21] sm:$0xff]
    %v610 = vld [vmem:[#allocation2 + $0x2] sm:$0xff]
    %v611 = vld [vmem:[#allocation2 + $0xa] sm:$0xff]
    %v612 = vld [vmem:[#allocation2 + $0x1a] sm:$0xff]
    %v613 = vld [vmem:[#allocation2 + $0x22] sm:$0xff]
    %v614 = vpack.c.bf16 %v603, %v602
    %v615 = vpack.c.bf16 %v607, %v606
    %v616 = vpack.c.bf16 %v611, %v610
    %v617 = vpack.c.bf16 %v605, %v604
    %v618 = vpack.c.bf16 %v609, %v608
    %v619 = vpack.c.bf16 %v613, %v612
    %v620 = vld [vmem:[%s2] sm:$0xf]
    %v621 = vld [vmem:[%s2 + $0x4] sm:$0xf]
    %v622 = vld [vmem:[%s2 + $0x8] sm:$0xf]
    %v623 = vld [vmem:[%s2 + $0xc] sm:$0xf]
    %v624 = vld [vmem:[%s2 + $0x10] sm:$0xf]
    %v625 = vld [vmem:[%s2 + $0x14] sm:$0xf]
    %v626 = vld [vmem:[%s2 + $0x18] sm:$0xf]
    %v627 = vld [vmem:[%s2 + $0x1c] sm:$0xf]
    %v628 = vld [vmem:[%s2 + $0x20] sm:$0xf]
    %v629 = vld [vmem:[%s2 + $0x24] sm:$0xf]
    %v630 = vld [vmem:[%s2 + $0x28] sm:$0xf]
    %v631 = vld [vmem:[%s2 + $0x2c] sm:$0xf]
    %v632 = vld [vmem:[%s2 + $0x30] sm:$0xf]
    %v633 = vld [vmem:[%s2 + $0x34] sm:$0xf]
    %v634 = vld [vmem:[%s2 + $0x38] sm:$0xf]
    %v635 = vld [vmem:[%s2 + $0x3c] sm:$0xf]
    %v636 = vld [vmem:[%s2 + $0x40] sm:$0xf]
    %v637 = vld [vmem:[%s2 + $0x44] sm:$0xf]
    %v638 = vld [vmem:[%s2 + $0x48] sm:$0xf]
    %v639 = vld [vmem:[%s2 + $0x4c] sm:$0xf]
    %v640 = vld [vmem:[%s2 + $0x50] sm:$0xf]
    %v641 = vld [vmem:[%s2 + $0x54] sm:$0xf]
    %v642 = vld [vmem:[%s2 + $0x58] sm:$0xf]
    %v643 = vld [vmem:[%s2 + $0x5c] sm:$0xf]
    %v644 = vld [vmem:[%s2 + $0x60] sm:$0xf]
    %v645 = vld [vmem:[%s2 + $0x64] sm:$0xf]
    %v646 = vld [vmem:[%s2 + $0x68] sm:$0xf]
    %v647 = vld [vmem:[%s2 + $0x6c] sm:$0xf]
    %v648 = vld [vmem:[%s2 + $0x70] sm:$0xf]
    %v649 = vld [vmem:[%s2 + $0x74] sm:$0xf]
    %v650 = vld [vmem:[%s2 + $0x78] sm:$0xf]
    %v651 = vld [vmem:[%s2 + $0x7c] sm:$0xf]
    %v652 = vld [vmem:[%s2 + $0x80] sm:$0xf]
    %v653 = vld [vmem:[%s2 + $0x84] sm:$0xf]
    %v654 = vld [vmem:[%s2 + $0x88] sm:$0xf]
    %v655 = vld [vmem:[%s2 + $0x8c] sm:$0xf]
    %v656 = vld [vmem:[%s2 + $0x90] sm:$0xf]
    %v657 = vld [vmem:[%s2 + $0x94] sm:$0xf]
    %v658 = vld [vmem:[%s2 + $0x98] sm:$0xf]
    %v659 = vld [vmem:[%s2 + $0x9c] sm:$0xf]
    %v660 = vld [vmem:[%s2 + $0xa0] sm:$0xf]
    %v661 = vld [vmem:[%s2 + $0xa4] sm:$0xf]
    %v662 = vld [vmem:[%s2 + $0xa8] sm:$0xf]
    %v663 = vld [vmem:[%s2 + $0xac] sm:$0xf]
    %v664 = vld [vmem:[%s2 + $0xb0] sm:$0xf]
    %v665 = vld [vmem:[%s2 + $0xb4] sm:$0xf]
    %v666 = vld [vmem:[%s2 + $0xb8] sm:$0xf]
    %v667 = vld [vmem:[%s2 + $0xbc] sm:$0xf]
    %v716 = vunpack.c.l.b16 %v620
    %v717 = vunpack.c.l.b16 %v621
    %v718 = vunpack.c.l.b16 %v622
    %v719 = vunpack.c.l.b16 %v623
    %v720 = vunpack.c.l.b16 %v624
    %v721 = vunpack.c.l.b16 %v625
    %v722 = vunpack.c.l.b16 %v626
    %v723 = vunpack.c.l.b16 %v627
    %v724 = vunpack.c.l.b16 %v628
    %v725 = vunpack.c.l.b16 %v629
    %v726 = vunpack.c.l.b16 %v630
    %v727 = vunpack.c.l.b16 %v631
    %v728 = vunpack.c.l.b16 %v632
    %v729 = vunpack.c.l.b16 %v633
    %v730 = vunpack.c.l.b16 %v634
    %v731 = vunpack.c.l.b16 %v635
    %v732 = vunpack.c.l.b16 %v636
    %v733 = vunpack.c.l.b16 %v637
    %v734 = vunpack.c.l.b16 %v638
    %v735 = vunpack.c.l.b16 %v639
    %v736 = vunpack.c.l.b16 %v640
    %v737 = vunpack.c.l.b16 %v641
    %v738 = vunpack.c.l.b16 %v642
    %v739 = vunpack.c.l.b16 %v643
    %v740 = vunpack.c.l.b16 %v644
    %v741 = vunpack.c.l.b16 %v645
    %v742 = vunpack.c.l.b16 %v646
    %v743 = vunpack.c.l.b16 %v647
    %v744 = vunpack.c.l.b16 %v648
    %v745 = vunpack.c.l.b16 %v649
    %v746 = vunpack.c.l.b16 %v650
    %v747 = vunpack.c.l.b16 %v651
    %v748 = vunpack.c.l.b16 %v652
    %v749 = vunpack.c.l.b16 %v653
    %v750 = vunpack.c.l.b16 %v654
    %v751 = vunpack.c.l.b16 %v655
    %v752 = vunpack.c.l.b16 %v656
    %v753 = vunpack.c.l.b16 %v657
    %v754 = vunpack.c.l.b16 %v658
    %v755 = vunpack.c.l.b16 %v659
    %v756 = vunpack.c.l.b16 %v660
    %v757 = vunpack.c.l.b16 %v661
    %v758 = vunpack.c.l.b16 %v662
    %v759 = vunpack.c.l.b16 %v663
    %v760 = vunpack.c.l.b16 %v664
    %v761 = vunpack.c.l.b16 %v665
    %v762 = vunpack.c.l.b16 %v666
    %v763 = vunpack.c.l.b16 %v667
    %v764 = vpack.c.b16 %v717, %v716
    %v765 = vpack.c.b16 %v719, %v718
    %v766 = vpack.c.b16 %v721, %v720
    %v767 = vpack.c.b16 %v723, %v722
    %v768 = vpack.c.b16 %v725, %v724
    %v769 = vpack.c.b16 %v727, %v726
    %v770 = vpack.c.b16 %v729, %v728
    %v771 = vpack.c.b16 %v731, %v730
    %v772 = vpack.c.b16 %v733, %v732
    %v773 = vpack.c.b16 %v735, %v734
    %v774 = vpack.c.b16 %v737, %v736
    %v775 = vpack.c.b16 %v739, %v738
    %v776 = vpack.c.b16 %v741, %v740
    %v777 = vpack.c.b16 %v743, %v742
    %v778 = vpack.c.b16 %v745, %v744
    %v779 = vpack.c.b16 %v747, %v746
    %v780 = vpack.c.b16 %v749, %v748
    %v781 = vpack.c.b16 %v751, %v750
    %v782 = vpack.c.b16 %v753, %v752
    %v783 = vpack.c.b16 %v755, %v754
    %v784 = vpack.c.b16 %v757, %v756
    %v785 = vpack.c.b16 %v759, %v758
    %v786 = vpack.c.b16 %v761, %v760
    %v787 = vpack.c.b16 %v763, %v762
    %812 = vmatprep.subr.bf16.mxu0 0
    %813 = vmatpush1.bf16.msra.mxu0 %v764
    %814 = vmatprep.subr.bf16.mxu0 0
    %815 = vmatpush1.bf16.msra.mxu0 %v765
    %816 = vmatprep.subr.bf16.mxu0 0
    %817 = vmatpush1.bf16.msra.mxu0 %v766
    %818 = vmatprep.subr.bf16.mxu0 0
    %819 = vmatpush1.bf16.msra.mxu0 %v767
    %820 = vmatprep.subr.bf16.mxu0 0
    %821 = vmatpush1.bf16.msra.mxu0 %v768
    %822 = vmatprep.subr.bf16.mxu0 0
    %823 = vmatpush1.bf16.msra.mxu0 %v769
    %824 = vmatprep.subr.bf16.mxu0 0
    %825 = vmatpush1.bf16.msra.mxu0 %v770
    %826 = vmatprep.subr.bf16.mxu0 0
    %827 = vmatpush1.bf16.msra.mxu0 %v771
    %828 = vmatprep.subr.bf16.mxu0 0
    %829 = vmatpush1.bf16.msra.mxu0 %v772
    %830 = vmatprep.subr.bf16.mxu0 0
    %831 = vmatpush1.bf16.msra.mxu0 %v773
    %832 = vmatprep.subr.bf16.mxu0 0
    %833 = vmatpush1.bf16.msra.mxu0 %v774
    %834 = vmatprep.subr.bf16.mxu0 0
    %835 = vmatpush1.bf16.msra.mxu0 %v775
    %836 = vmatprep.subr.bf16.mxu0 0
    %837 = vmatpush1.bf16.msra.mxu0 %v776
    %838 = vmatprep.subr.bf16.mxu0 0
    %839 = vmatpush1.bf16.msra.mxu0 %v777
    %840 = vmatprep.subr.bf16.mxu0 0
    %841 = vmatpush1.bf16.msra.mxu0 %v778
    %842 = vmatprep.subr.bf16.mxu0 0
    %843 = vmatpush1.bf16.msra.mxu0 %v779
    %844 = vmatprep.mubr.bf16.mxu0 %v615
    %845 = vmatmul.mubr.bf16.gmra.mrb[0].mxu0 %v614
    %v846 = vpop.f32.mrb[0].mxu0
    %v847 = vadd.f32 0.0, %v846
    %v848 = vpop.f32.mrb[0].mxu0
    %v849 = vpop.f32.mrb[0].mxu0
    %v850 = vadd.f32 0.0, %v849
    %v851 = vpop.f32.mrb[0].mxu0
    %852 = vmatprep.mubr.bf16.mxu0 %v618
    %853 = vmatmul.mubr.bf16.gmra.mrb[0].mxu0 %v617
    %v854 = vpop.f32.mrb[0].mxu0
    %v855 = vadd.f32 0.0, %v854
    %v856 = vpop.f32.mrb[0].mxu0
    %v857 = vpop.f32.mrb[0].mxu0
    %v858 = vadd.f32 0.0, %v857
    %v859 = vpop.f32.mrb[0].mxu0
    %860 = vdwg.mxu0
    %861 = vmatprep.subr.bf16.mxu0 0
    %862 = vmatpush1.bf16.msra.mxu0 %v780
    %863 = vmatprep.subr.bf16.mxu0 0
    %864 = vmatpush1.bf16.msra.mxu0 %v781
    %865 = vmatprep.subr.bf16.mxu0 0
    %866 = vmatpush1.bf16.msra.mxu0 %v782
    %867 = vmatprep.subr.bf16.mxu0 0
    %868 = vmatpush1.bf16.msra.mxu0 %v783
    %869 = vmatprep.subr.bf16.mxu0 0
    %870 = vmatpush1.bf16.msra.mxu0 %v784
    %871 = vmatprep.subr.bf16.mxu0 0
    %872 = vmatpush1.bf16.msra.mxu0 %v785
    %873 = vmatprep.subr.bf16.mxu0 0
    %874 = vmatpush1.bf16.msra.mxu0 %v786
    %875 = vmatprep.subr.bf16.mxu0 0
    %876 = vmatpush1.bf16.msra.mxu0 %v787
    %877 = vmatprep.subr.bf16.mxu0 0
    %878 = vmatpush1.bf16.msra.mxu0 0
    %879 = vmatprep.subr.bf16.mxu0 0
    %880 = vmatpush1.bf16.msra.mxu0 0
    %881 = vmatprep.subr.bf16.mxu0 0
    %882 = vmatpush1.bf16.msra.mxu0 0
    %883 = vmatprep.subr.bf16.mxu0 0
    %884 = vmatpush1.bf16.msra.mxu0 0
    %885 = vmatprep.subr.bf16.mxu0 0
    %886 = vmatpush1.bf16.msra.mxu0 0
    %887 = vmatprep.subr.bf16.mxu0 0
    %888 = vmatpush1.bf16.msra.mxu0 0
    %889 = vmatprep.subr.bf16.mxu0 0
    %890 = vmatpush1.bf16.msra.mxu0 0
    %891 = vmatprep.subr.bf16.mxu0 0
    %892 = vmatpush1.bf16.msra.mxu0 0
    %893 = vmatprep.mubr.bf16.mxu0 0
    %894 = vmatmul.mubr.bf16.gmra.mrb[0].mxu0 %v616
    %v895 = vpop.f32.mrb[0].mxu0
    %v896 = vadd.f32 %v847, %v895
    %v897 = vpop.f32.mrb[0].mxu0
    %v898 = vpop.f32.mrb[0].mxu0
    %v899 = vadd.f32 %v850, %v898
    %v900 = vpop.f32.mrb[0].mxu0
    %901 = vmatprep.mubr.bf16.mxu0 0
    %902 = vmatmul.mubr.bf16.gmra.mrb[0].mxu0 %v619
    %v903 = vpop.f32.mrb[0].mxu0
    %v904 = vadd.f32 %v855, %v903
    %v905 = vpop.f32.mrb[0].mxu0
    %v906 = vpop.f32.mrb[0].mxu0
    %v907 = vadd.f32 %v858, %v906
    %v908 = vpop.f32.mrb[0].mxu0
    %909 = vdwg.mxu0
    %v910 = vadd.f32 %v896, %v899
    %v911 = vadd.f32 %v910, %v904
    %v912 = vadd.f32 %v911, %v907
    %v913 = vrot.slane %v912, 4
    %v914 = vadd.f32 %v912, %v913
    %v915 = vrot.slane %v914, 2
    %v916 = vadd.f32 %v914, %v915
    %v917 = vrot.slane %v916, 1
    %v918 = vadd.f32 %v916, %v917
    %v919 = vmul.f32 %v896, %v896
    %v920 = vmul.f32 %v899, %v899
    %v921 = vmul.f32 %v904, %v904
    %v922 = vmul.f32 %v907, %v907
    %v923 = vadd.f32 %v919, %v920
    %v924 = vadd.f32 %v923, %v921
    %v925 = vadd.f32 %v924, %v922
    %v926 = vrot.slane %v925, 4
    %v927 = vadd.f32 %v925, %v926
    %v928 = vrot.slane %v927, 2
    %v929 = vadd.f32 %v927, %v928
    %v930 = vrot.slane %v929, 1
    %v931 = vadd.f32 %v929, %v930
    %v932 = vld [vmem:[%s3] sm:$0xff]
    %v933 = vld [vmem:[%s3 + $0x8] sm:$0xff]
    %v934 = vld [vmem:[%s3 + $0x10] sm:$0xff]
    %v935 = vld [vmem:[%s3 + $0x18] sm:$0xff]
    %v936 = vld [vmem:[%s3 + $0x20] sm:$0xff]
    %v937 = vld [vmem:[%s3 + $0x28] sm:$0xff]
    %v938 = vld [vmem:[%s3 + $0x30] sm:$0xff]
    %v939 = vld [vmem:[%s3 + $0x38] sm:$0xff]
    %v940 = vld [vmem:[%s3 + $0x40] sm:$0xff]
    %v941 = vld [vmem:[%s3 + $0x48] sm:$0xff]
    %v942 = vld [vmem:[%s3 + $0x50] sm:$0xff]
    %v943 = vld [vmem:[%s3 + $0x58] sm:$0xff]
    %v944 = vld [vmem:[%s3 + $0x60] sm:$0xff]
    %v945 = vld [vmem:[%s3 + $0x68] sm:$0xff]
    %v946 = vld [vmem:[%s3 + $0x70] sm:$0xff]
    %v947 = vld [vmem:[%s3 + $0x78] sm:$0xff]
    %948 = vmatprep.subr.mxu0 0.0
    %949 = vmatpush1.msra.mxu0 %v932
    %950 = vmatprep.subr.mxu0 0.0
    %951 = vmatpush1.msra.mxu0 %v933
    %952 = vmatprep.subr.mxu0 0.0
    %953 = vmatpush1.msra.mxu0 %v934
    %954 = vmatprep.subr.mxu0 0.0
    %955 = vmatpush1.msra.mxu0 %v935
    %956 = vmatprep.subr.mxu0 0.0
    %957 = vmatpush1.msra.mxu0 %v936
    %958 = vmatprep.subr.mxu0 0.0
    %959 = vmatpush1.msra.mxu0 %v937
    %960 = vmatprep.subr.mxu0 0.0
    %961 = vmatpush1.msra.mxu0 %v938
    %962 = vmatprep.subr.mxu0 0.0
    %963 = vmatpush1.msra.mxu0 %v939
    %964 = vmatprep.subr.mxu0 0.0
    %965 = vmatpush1.msra.mxu0 %v940
    %966 = vmatprep.subr.mxu0 0.0
    %967 = vmatpush1.msra.mxu0 %v941
    %968 = vmatprep.subr.mxu0 0.0
    %969 = vmatpush1.msra.mxu0 %v942
    %970 = vmatprep.subr.mxu0 0.0
    %971 = vmatpush1.msra.mxu0 %v943
    %972 = vmatprep.subr.mxu0 0.0
    %973 = vmatpush1.msra.mxu0 %v944
    %974 = vmatprep.subr.mxu0 0.0
    %975 = vmatpush1.msra.mxu0 %v945
    %976 = vmatprep.subr.mxu0 0.0
    %977 = vmatpush1.msra.mxu0 %v946
    %978 = vmatprep.subr.mxu0 0.0
    %979 = vmatpush1.msra.mxu0 %v947
    %980 = vmatprep.subr.mxu0 0.0
    %981 = vmatpush1.msra.mxu0 0.0
    %982 = vmatprep.subr.mxu0 0.0
    %983 = vmatpush1.msra.mxu0 0.0
    %984 = vmatprep.subr.mxu0 0.0
    %985 = vmatpush1.msra.mxu0 0.0
    %986 = vmatprep.subr.mxu0 0.0
    %987 = vmatpush1.msra.mxu0 0.0
    %988 = vmatprep.subr.mxu0 0.0
    %989 = vmatpush1.msra.mxu0 0.0
    %990 = vmatprep.subr.mxu0 0.0
    %991 = vmatpush1.msra.mxu0 0.0
    %992 = vmatprep.subr.mxu0 0.0
    %993 = vmatpush1.msra.mxu0 0.0
    %994 = vmatprep.subr.mxu0 0.0
    %995 = vmatpush1.msra.mxu0 0.0
    %996 = vmatprep.subr.mxu0 0.0
    %997 = vmatpush1.msra.mxu0 0.0
    %998 = vmatprep.subr.mxu0 0.0
    %999 = vmatpush1.msra.mxu0 0.0
    %1000 = vmatprep.subr.mxu0 0.0
    %1001 = vmatpush1.msra.mxu0 0.0
    %1002 = vmatprep.subr.mxu0 0.0
    %1003 = vmatpush1.msra.mxu0 0.0
    %1004 = vmatprep.subr.mxu0 0.0
    %1005 = vmatpush1.msra.mxu0 0.0
    %1006 = vmatprep.subr.mxu0 0.0
    %1007 = vmatpush1.msra.mxu0 0.0
    %1008 = vmatprep.subr.mxu0 0.0
    %1009 = vmatpush1.msra.mxu0 0.0
    %1010 = vmatprep.subr.mxu0 0.0
    %1011 = vmatpush1.msra.mxu0 0.0
    %1012 = vmatprep.mubr.f32.mxu0 0.0
    %1013 = vmatmul.mubr.f32.gmra.mrb[0].mxu0 %v918
    %v1014 = vpop.f32.mrb[0].mxu0
    %v1015 = vadd.f32 0.0, %v1014
    %v1016 = vpop.f32.mrb[0].mxu0
    %1017 = vdwg.mxu0
    %1018 = vmatprep.subr.mxu0 0.0
    %1019 = vmatpush1.msra.mxu0 %v932
    %1020 = vmatprep.subr.mxu0 0.0
    %1021 = vmatpush1.msra.mxu0 %v933
    %1022 = vmatprep.subr.mxu0 0.0
    %1023 = vmatpush1.msra.mxu0 %v934
    %1024 = vmatprep.subr.mxu0 0.0
    %1025 = vmatpush1.msra.mxu0 %v935
    %1026 = vmatprep.subr.mxu0 0.0
    %1027 = vmatpush1.msra.mxu0 %v936
    %1028 = vmatprep.subr.mxu0 0.0
    %1029 = vmatpush1.msra.mxu0 %v937
    %1030 = vmatprep.subr.mxu0 0.0
    %1031 = vmatpush1.msra.mxu0 %v938
    %1032 = vmatprep.subr.mxu0 0.0
    %1033 = vmatpush1.msra.mxu0 %v939
    %1034 = vmatprep.subr.mxu0 0.0
    %1035 = vmatpush1.msra.mxu0 %v940
    %1036 = vmatprep.subr.mxu0 0.0
    %1037 = vmatpush1.msra.mxu0 %v941
    %1038 = vmatprep.subr.mxu0 0.0
    %1039 = vmatpush1.msra.mxu0 %v942
    %1040 = vmatprep.subr.mxu0 0.0
    %1041 = vmatpush1.msra.mxu0 %v943
    %1042 = vmatprep.subr.mxu0 0.0
    %1043 = vmatpush1.msra.mxu0 %v944
    %1044 = vmatprep.subr.mxu0 0.0
    %1045 = vmatpush1.msra.mxu0 %v945
    %1046 = vmatprep.subr.mxu0 0.0
    %1047 = vmatpush1.msra.mxu0 %v946
    %1048 = vmatprep.subr.mxu0 0.0
    %1049 = vmatpush1.msra.mxu0 %v947
    %1050 = vmatprep.subr.mxu0 0.0
    %1051 = vmatpush1.msra.mxu0 0.0
    %1052 = vmatprep.subr.mxu0 0.0
    %1053 = vmatpush1.msra.mxu0 0.0
    %1054 = vmatprep.subr.mxu0 0.0
    %1055 = vmatpush1.msra.mxu0 0.0
    %1056 = vmatprep.subr.mxu0 0.0
    %1057 = vmatpush1.msra.mxu0 0.0
    %1058 = vmatprep.subr.mxu0 0.0
    %1059 = vmatpush1.msra.mxu0 0.0
    %1060 = vmatprep.subr.mxu0 0.0
    %1061 = vmatpush1.msra.mxu0 0.0
    %1062 = vmatprep.subr.mxu0 0.0
    %1063 = vmatpush1.msra.mxu0 0.0
    %1064 = vmatprep.subr.mxu0 0.0
    %1065 = vmatpush1.msra.mxu0 0.0
    %1066 = vmatprep.subr.mxu0 0.0
    %1067 = vmatpush1.msra.mxu0 0.0
    %1068 = vmatprep.subr.mxu0 0.0
    %1069 = vmatpush1.msra.mxu0 0.0
    %1070 = vmatprep.subr.mxu0 0.0
    %1071 = vmatpush1.msra.mxu0 0.0
    %1072 = vmatprep.subr.mxu0 0.0
    %1073 = vmatpush1.msra.mxu0 0.0
    %1074 = vmatprep.subr.mxu0 0.0
    %1075 = vmatpush1.msra.mxu0 0.0
    %1076 = vmatprep.subr.mxu0 0.0
    %1077 = vmatpush1.msra.mxu0 0.0
    %1078 = vmatprep.subr.mxu0 0.0
    %1079 = vmatpush1.msra.mxu0 0.0
    %1080 = vmatprep.subr.mxu0 0.0
    %1081 = vmatpush1.msra.mxu0 0.0
    %1082 = vmatprep.mubr.f32.mxu0 0.0
    %1083 = vmatmul.mubr.f32.gmra.mrb[0].mxu0 %v931
    %v1084 = vpop.f32.mrb[0].mxu0
    %v1085 = vadd.f32 0.0, %v1084
    %v1086 = vpop.f32.mrb[0].mxu0
    %1087 = vdwg.mxu0
    %v1088 = vmul.f32 %v1015, 0.001953125
    %v1089 = vmul.f32 %v1085, 0.001953125
    %v1090 = vmul.f32 %v1088, %v1088
    %v1091 = vsub.f32 %v1089, %v1090
    %v1092 = vmax.f32 %v1091, 0.0
    %v1093 = vadd.f32 %v1092, 1e-05
    %v1094 = vrsqrt.pop %v1093
    %v1095 = vld [vmem:[%s7] sm:$0x1]
    %v1096 = vmul.f32 %v1095, %v1094
    %v1097 = vld [vmem:[%s8] sm:$0x1]
    %v1098 = vmul.f32 %v1088, %v1096
    %v1099 = vsub.f32 %v1097, %v1098
    %v1100 = vld [vmem:[%s4] sm:$0xff]
    %v1102 = vsel %vm427, %v1096, 0
    %1104 = vmatprep.subr.mxu0 0.0
    %1105 = vmatpush1.msra.mxu0 %v1100
    %1106 = vmatprep.subr.mxu0 0.0
    %1107 = vmatpush1.msra.mxu0 0.0
    %1108 = vmatprep.subr.mxu0 0.0
    %1109 = vmatpush1.msra.mxu0 0.0
    %1110 = vmatprep.subr.mxu0 0.0
    %1111 = vmatpush1.msra.mxu0 0.0
    %1112 = vmatprep.subr.mxu0 0.0
    %1113 = vmatpush1.msra.mxu0 0.0
    %1114 = vmatprep.subr.mxu0 0.0
    %1115 = vmatpush1.msra.mxu0 0.0
    %1116 = vmatprep.subr.mxu0 0.0
    %1117 = vmatpush1.msra.mxu0 0.0
    %1118 = vmatprep.subr.mxu0 0.0
    %1119 = vmatpush1.msra.mxu0 0.0
    %1120 = vmatprep.subr.mxu0 0.0
    %1121 = vmatpush1.msra.mxu0 0.0
    %1122 = vmatprep.subr.mxu0 0.0
    %1123 = vmatpush1.msra.mxu0 0.0
    %1124 = vmatprep.subr.mxu0 0.0
    %1125 = vmatpush1.msra.mxu0 0.0
    %1126 = vmatprep.subr.mxu0 0.0
    %1127 = vmatpush1.msra.mxu0 0.0
    %1128 = vmatprep.subr.mxu0 0.0
    %1129 = vmatpush1.msra.mxu0 0.0
    %1130 = vmatprep.subr.mxu0 0.0
    %1131 = vmatpush1.msra.mxu0 0.0
    %1132 = vmatprep.subr.mxu0 0.0
    %1133 = vmatpush1.msra.mxu0 0.0
    %1134 = vmatprep.subr.mxu0 0.0
    %1135 = vmatpush1.msra.mxu0 0.0
    %1136 = vmatprep.subr.mxu0 0.0
    %1137 = vmatpush1.msra.mxu0 0.0
    %1138 = vmatprep.subr.mxu0 0.0
    %1139 = vmatpush1.msra.mxu0 0.0
    %1140 = vmatprep.subr.mxu0 0.0
    %1141 = vmatpush1.msra.mxu0 0.0
    %1142 = vmatprep.subr.mxu0 0.0
    %1143 = vmatpush1.msra.mxu0 0.0
    %1144 = vmatprep.subr.mxu0 0.0
    %1145 = vmatpush1.msra.mxu0 0.0
    %1146 = vmatprep.subr.mxu0 0.0
    %1147 = vmatpush1.msra.mxu0 0.0
    %1148 = vmatprep.subr.mxu0 0.0
    %1149 = vmatpush1.msra.mxu0 0.0
    %1150 = vmatprep.subr.mxu0 0.0
    %1151 = vmatpush1.msra.mxu0 0.0
    %1152 = vmatprep.subr.mxu0 0.0
    %1153 = vmatpush1.msra.mxu0 0.0
    %1154 = vmatprep.subr.mxu0 0.0
    %1155 = vmatpush1.msra.mxu0 0.0
    %1156 = vmatprep.subr.mxu0 0.0
    %1157 = vmatpush1.msra.mxu0 0.0
    %1158 = vmatprep.subr.mxu0 0.0
    %1159 = vmatpush1.msra.mxu0 0.0
    %1160 = vmatprep.subr.mxu0 0.0
    %1161 = vmatpush1.msra.mxu0 0.0
    %1162 = vmatprep.subr.mxu0 0.0
    %1163 = vmatpush1.msra.mxu0 0.0
    %1164 = vmatprep.subr.mxu0 0.0
    %1165 = vmatpush1.msra.mxu0 0.0
    %1166 = vmatprep.subr.mxu0 0.0
    %1167 = vmatpush1.msra.mxu0 0.0
    %1168 = vmatprep.mubr.f32.mxu0 0.0
    %1169 = vmatmul.mubr.f32.gmra.mrb[0].mxu0 %v1102
    %v1170 = vpop.f32.mrb[0].mxu0
    %v1171 = vadd.f32 0.0, %v1170
    %v1172 = vpop.f32.mrb[0].mxu0
    %1173 = vdwg.mxu0
    %v1175 = vsel %vm427, %v1099, 0
    %1177 = vmatprep.subr.mxu0 0.0
    %1178 = vmatpush1.msra.mxu0 %v1100
    %1179 = vmatprep.subr.mxu0 0.0
    %1180 = vmatpush1.msra.mxu0 0.0
    %1181 = vmatprep.subr.mxu0 0.0
    %1182 = vmatpush1.msra.mxu0 0.0
    %1183 = vmatprep.subr.mxu0 0.0
    %1184 = vmatpush1.msra.mxu0 0.0
    %1185 = vmatprep.subr.mxu0 0.0
    %1186 = vmatpush1.msra.mxu0 0.0
    %1187 = vmatprep.subr.mxu0 0.0
    %1188 = vmatpush1.msra.mxu0 0.0
    %1189 = vmatprep.subr.mxu0 0.0
    %1190 = vmatpush1.msra.mxu0 0.0
    %1191 = vmatprep.subr.mxu0 0.0
    %1192 = vmatpush1.msra.mxu0 0.0
    %1193 = vmatprep.subr.mxu0 0.0
    %1194 = vmatpush1.msra.mxu0 0.0
    %1195 = vmatprep.subr.mxu0 0.0
    %1196 = vmatpush1.msra.mxu0 0.0
    %1197 = vmatprep.subr.mxu0 0.0
    %1198 = vmatpush1.msra.mxu0 0.0
    %1199 = vmatprep.subr.mxu0 0.0
    %1200 = vmatpush1.msra.mxu0 0.0
    %1201 = vmatprep.subr.mxu0 0.0
    %1202 = vmatpush1.msra.mxu0 0.0
    %1203 = vmatprep.subr.mxu0 0.0
    %1204 = vmatpush1.msra.mxu0 0.0
    %1205 = vmatprep.subr.mxu0 0.0
    %1206 = vmatpush1.msra.mxu0 0.0
    %1207 = vmatprep.subr.mxu0 0.0
    %1208 = vmatpush1.msra.mxu0 0.0
    %1209 = vmatprep.subr.mxu0 0.0
    %1210 = vmatpush1.msra.mxu0 0.0
    %1211 = vmatprep.subr.mxu0 0.0
    %1212 = vmatpush1.msra.mxu0 0.0
    %1213 = vmatprep.subr.mxu0 0.0
    %1214 = vmatpush1.msra.mxu0 0.0
    %1215 = vmatprep.subr.mxu0 0.0
    %1216 = vmatpush1.msra.mxu0 0.0
    %1217 = vmatprep.subr.mxu0 0.0
    %1218 = vmatpush1.msra.mxu0 0.0
    %1219 = vmatprep.subr.mxu0 0.0
    %1220 = vmatpush1.msra.mxu0 0.0
    %1221 = vmatprep.subr.mxu0 0.0
    %1222 = vmatpush1.msra.mxu0 0.0
    %1223 = vmatprep.subr.mxu0 0.0
    %1224 = vmatpush1.msra.mxu0 0.0
    %1225 = vmatprep.subr.mxu0 0.0
    %1226 = vmatpush1.msra.mxu0 0.0
    %1227 = vmatprep.subr.mxu0 0.0
    %1228 = vmatpush1.msra.mxu0 0.0
    %1229 = vmatprep.subr.mxu0 0.0
    %1230 = vmatpush1.msra.mxu0 0.0
    %1231 = vmatprep.subr.mxu0 0.0
    %1232 = vmatpush1.msra.mxu0 0.0
    %1233 = vmatprep.subr.mxu0 0.0
    %1234 = vmatpush1.msra.mxu0 0.0
    %1235 = vmatprep.subr.mxu0 0.0
    %1236 = vmatpush1.msra.mxu0 0.0
    %1237 = vmatprep.subr.mxu0 0.0
    %1238 = vmatpush1.msra.mxu0 0.0
    %1239 = vmatprep.subr.mxu0 0.0
    %1240 = vmatpush1.msra.mxu0 0.0
    %1241 = vmatprep.mubr.f32.mxu0 0.0
    %1242 = vmatmul.mubr.f32.gmra.mrb[0].mxu0 %v1175
    %v1243 = vpop.f32.mrb[0].mxu0
    %v1244 = vadd.f32 0.0, %v1243
    %v1245 = vpop.f32.mrb[0].mxu0
    %1246 = vdwg.mxu0
    %v1247 = vlaneseq
    %v1248 = vshrl.u32 %v1247, 7
    %v1249 = vsub.s32 0, %v1248
    %v1250 = vrot.slane %v1171, %v1249
    %v1251 = vmul.f32 %v896, %v1250
    %v1252 = vmul.f32 %v899, %v1250
    %v1253 = vmul.f32 %v904, %v1250
    %v1254 = vmul.f32 %v907, %v1250
    %v1255 = vlaneseq
    %v1256 = vshrl.u32 %v1255, 7
    %v1257 = vsub.s32 0, %v1256
    %v1258 = vrot.slane %v1244, %v1257
    %v1259 = vadd.f32 %v1251, %v1258
    %v1260 = vadd.f32 %v1252, %v1258
    %v1261 = vadd.f32 %v1253, %v1258
    %v1262 = vadd.f32 %v1254, %v1258
    %v1263 = vmax.f32 %v1259, 0.0
    %v1264 = vmax.f32 %v1260, 0.0
    %v1265 = vmax.f32 %v1261, 0.0
    %v1266 = vmax.f32 %v1262, 0.0
    %1267 = vst [vmem:[#allocation6] sm:$0xff] %v1263
    %1268 = vst [vmem:[#allocation6 + $0x8] sm:$0xff] %v1264
    %1269 = vst [vmem:[#allocation6 + $0x10] sm:$0xff] %v1265
    %1270 = vst [vmem:[#allocation6 + $0x18] sm:$0xff] %v1266
    // Predicated region
    $region42: #{tpu_custom_call.1} parent=1 // pred_check
      _
    $region43: #{tpu_custom_call.1} parent=1 // pred_check_branch
      %1272 = sbr.rel (0) target = $region45
    $region44: #{tpu_custom_call.1} parent=1 // pred_region
      %s1274 = ssub.s32 512, 512
      %1275 = vsyncadd [#allocation5], %s1274
      %s1276 = sshll.u32 [#allocation6], 4
      %s1277 = int_to_ptr.vmem [resolvable:$true] %s1276
      %1282 = dma.vmem_to_hbm [thread:$0]  %s1277, 512, %s9, [#allocation5], 128, 128, 8
    $region45: #{tpu_custom_call.1} parent=1 // pred_fallthru
      _
    // Predicated region
    $region46: #{tpu_custom_call.1} parent=1 // pred_check
      _
    $region47: #{tpu_custom_call.1} parent=1 // pred_check_branch
      %1284 = sbr.rel (0) target = $region49
    $region48: #{tpu_custom_call.1} parent=1 // pred_region
      %1285 = dma.done [#allocation5], 512
    $region49: #{tpu_custom_call.1} parent=1 // pred_fallthru
      _
    %1286 = vsyncpa [#allocation4], 1
    %1287 = vsyncpa [#allocation5], 1

</llo_original>
